<compile_context>
chip_gen: v7x
topology: tpu7x:2x2x1
jax: 0.10.0
libtpu: 0.0.40
codegen_flags: <defaults>
</compile_context>

<pallas_src>
import functools

import jax
import jax.numpy as jnp
from jax import lax
from jax.experimental import pallas as pl
from jax.experimental.pallas import tpu as pltpu


# ---------------------------------------------------------------------------
# Generation-aware VMEM budgeting.
# ---------------------------------------------------------------------------
_DEFAULT_VMEM_CAP = 64 << 20  # conservative (v7x per-TC) if the query fails


def _vmem_capacity_bytes():
    try:
        info = pltpu.get_tpu_info()
        cap = int(getattr(info, "vmem_capacity_bytes", _DEFAULT_VMEM_CAP))
        if cap > 0:
            return cap
    except Exception:
        pass
    return _DEFAULT_VMEM_CAP


def _vmem_plan():
    """Returns (vmem_limit_bytes for CompilerParams, block-sizing budget)."""
    cap = _vmem_capacity_bytes()
    # Leave ~16 MiB of physical VMEM for compiler scratch / semaphores:
    #   v5e/v6e: 128 MiB -> 112 MiB scoped; v7x: 64 MiB -> 48 MiB scoped.
    vmem_limit = min(max(32 << 20, cap - (16 << 20)), 112 << 20)
    # Size our own double-buffered blocks against a slightly smaller budget.
    budget = vmem_limit - (8 << 20)
    return vmem_limit, budget


def _round_down_128(v):
    return (v // 128) * 128


# ---------------------------------------------------------------------------
# Fused path: one grid step per batch-block, full-T lane-dense (bB, C, T).
# 2x HBM traffic (read x + write out); params stay resident in VMEM.
# ---------------------------------------------------------------------------
def _afms_fused_kernel(x_ref, wt_ref, b_ref, alpha_ref, o_ref, *, inv_t):
    # x_ref: (bB, C, T); wt_ref: (C, C) f32 pre-transposed; b_ref/alpha_ref: (1, C)
    x = x_ref[...]
    # f32-accumulated mean over time (== F.adaptive_avg_pool1d(x, 1)); dtype=
    # arg avoids materializing a slab-sized f32 upcast for bf16 inputs.
    mean = jnp.sum(x, axis=-1, dtype=jnp.float32) * inv_t            # (bB, C)
    z = jnp.dot(mean, wt_ref[...], preferred_element_type=jnp.float32)
    gate = jax.nn.sigmoid(z + b_ref[...]).astype(x.dtype)[:, :, None]  # (bB, C, 1)
    alpha = alpha_ref[...].astype(x.dtype)[:, :, None]                 # (1, C, 1)
    o_ref[...] = ((x + alpha) * gate).astype(o_ref.dtype)


def _afms_fused(x, w_t, b_row, alpha_row, bB, vmem_limit, donate_x):
    B, C, T = x.shape
    kernel = functools.partial(_afms_fused_kernel, inv_t=1.0 / T)
    return pl.pallas_call(
        kernel,
        out_shape=jax.ShapeDtypeStruct((B, C, T), x.dtype),
        grid=(B // bB,),
        in_specs=[
            pl.BlockSpec((bB, C, T), lambda i: (i, 0, 0)),
            pl.BlockSpec((C, C), lambda i: (0, 0)),
            pl.BlockSpec((1, C), lambda i: (0, 0)),
            pl.BlockSpec((1, C), lambda i: (0, 0)),
        ],
        out_specs=pl.BlockSpec((bB, C, T), lambda i: (i, 0, 0)),
        compiler_params=pltpu.CompilerParams(
            dimension_semantics=("parallel",),
            vmem_limit_bytes=vmem_limit),
        input_output_aliases=({0: 0} if donate_x else {}),
    )(x, w_t, b_row, alpha_row)


# ---------------------------------------------------------------------------
# Two-pass path for large per-batch slabs.
#   Pass 1: per-batch mean over T (grid over T tiles, lane-dense (B, C) out).
#   fc+sigmoid: one (B, C) @ (C, C) matmul in plain JAX (outside the stream).
#   Pass 2: streamed elementwise apply, (1, C, tile_T) lane-dense blocks.
# ---------------------------------------------------------------------------
def _afms_mean_kernel(x_ref, mean_ref, *, inv_t, t_total, tile_t, need_mask):
    t = pl.program_id(0)

    @pl.when(t == 0)
    def _init():
        mean_ref[...] = jnp.zeros_like(mean_ref)

    x = x_ref[...]                                              # (B, C, tile_t)
    if need_mask:  # masked tail for non-128-aligned / non-divisible T
        pos = t * tile_t + lax.broadcasted_iota(jnp.int32, x.shape, 2)
        x = jnp.where(pos < t_total, x, jnp.zeros_like(x))
    mean_ref[...] += jnp.sum(x, axis=-1, dtype=jnp.float32)     # (B, C) f32

    @pl.when(t == pl.num_programs(0) - 1)
    def _finalize():
        mean_ref[...] *= inv_t


def _afms_mean(x, tile_t, vmem_limit):
    B, C, T = x.shape
    n_t = -(-T // tile_t)
    kernel = functools.partial(
        _afms_mean_kernel, inv_t=1.0 / T, t_total=T, tile_t=tile_t,
        need_mask=(T % tile_t != 0))
    return pl.pallas_call(
        kernel,
        out_shape=jax.ShapeDtypeStruct((B, C), jnp.float32),
        grid=(n_t,),
        in_specs=[pl.BlockSpec((B, C, tile_t), lambda t: (0, 0, t))],
        out_specs=pl.BlockSpec((B, C), lambda t: (0, 0)),
        compiler_params=pltpu.CompilerParams(
            dimension_semantics=("arbitrary",),
            vmem_limit_bytes=vmem_limit),
    )(x)


def _afms_apply_kernel(x_ref, y_ref, alpha_ref, o_ref):
    b = pl.program_id(0)
    x = x_ref[...]                                               # (1, C, tile_t)
    gate = y_ref[pl.ds(b, 1), :].astype(x.dtype)[:, :, None]     # (1, C, 1)
    alpha = alpha_ref[...].astype(x.dtype)[:, :, None]           # (1, C, 1)
    o_ref[...] = ((x + alpha) * gate).astype(o_ref.dtype)


def _afms_apply(x, y, alpha_row, tile_t, vmem_limit, donate_x):
    B, C, T = x.shape
    n_t = -(-T // tile_t)
    return pl.pallas_call(
        _afms_apply_kernel,
        out_shape=jax.ShapeDtypeStruct((B, C, T), x.dtype),
        grid=(B, n_t),
        in_specs=[
            pl.BlockSpec((1, C, tile_t), lambda b, t: (b, 0, t)),
            pl.BlockSpec((B, C), lambda b, t: (0, 0)),     # tiny, resident, lane-dense
            pl.BlockSpec((1, C), lambda b, t: (0, 0)),
        ],
        out_specs=pl.BlockSpec((1, C, tile_t), lambda b, t: (b, 0, t)),
        compiler_params=pltpu.CompilerParams(
            dimension_semantics=("parallel", "parallel"),
            vmem_limit_bytes=vmem_limit),
        input_output_aliases=({0: 0} if donate_x else {}),
    )(x, y, alpha_row)


# ---------------------------------------------------------------------------
# Tile sizing against the real double-buffered footprint.
# ---------------------------------------------------------------------------
def _pick_apply_tile(C, T, itemsize, budget_bytes, batch):
    t_pad = ((T + 127) // 128) * 128
    # input + output (1, C, tile) blocks, each double-buffered -> ~4 copies.
    max_tile = _round_down_128(budget_bytes // (4 * C * itemsize))
    tile = max(128, min(t_pad, max_tile))
    if batch == 1 and t_pad >= 256:
        # Keep >= 2 time tiles so the "parallel" T axis can use both TCs (v7x).
        tile = min(tile, max(128, _round_down_128(t_pad // 2)))
    return tile


def _pick_gate_tile(B, C, T, itemsize, budget_bytes):
    t_pad = ((T + 127) // 128) * 128
    # input (B, C, tile) block, double-buffered; (B, C) f32 output is resident.
    max_tile = _round_down_128(
        max(0, budget_bytes - B * C * 4) // (2 * B * C * itemsize))
    return max(128, min(t_pad, max_tile))   # 128 floor: B*C would have to be huge


def _largest_fitting_batch_block(B, row_bytes, max_slab_bytes):
    for bB in range(B, 0, -1):
        if B % bB == 0 and bB * row_bytes <= max_slab_bytes:
            return bB
    return None


# ---------------------------------------------------------------------------
# Wrapper.
# ---------------------------------------------------------------------------
def afms_forward(x, w, b, alpha, *, force_two_pass=False, tile_t_gate=None,
                 tile_t_apply=None, donate_x=False):
    """AFMS forward. x: (B, C, T); w: (C, C); b: (C,); alpha: (C, 1)."""
    B, C, T = x.shape
    itemsize = x.dtype.itemsize
    w_t = jnp.asarray(w).T.astype(jnp.float32)          # transpose once, f32
    b_row = jnp.asarray(b).reshape(1, C).astype(jnp.float32)
    alpha_row = jnp.asarray(alpha).reshape(1, C)

    vmem_limit, budget = _vmem_plan()
    row_bytes = C * T * itemsize
    params_bytes = 2 * (C * C * 4 + 2 * C * 4 + C * itemsize)  # double-buffered
    max_slab = max(0, (budget - params_bytes) // 4)            # in+out, 2x buffered

    two_pass = force_two_pass
    bB = None
    if not two_pass:
        bB = _largest_fitting_batch_block(B, row_bytes, max_slab)
        if bB is None:
            two_pass = True
        elif B == 1 and row_bytes >= (8 << 20) and T >= 256:
            # Single huge batch row: fused grid has one step, which strands one
            # TensorCore on v7x.  Stream time tiles so the "parallel" T axis of
            # the apply pass can split across cores.
            two_pass = True

    if not two_pass:
        return _afms_fused(x, w_t, b_row, alpha_row, bB, vmem_limit, donate_x)

    tg = tile_t_gate if tile_t_gate is not None else _pick_gate_tile(
        B, C, T, itemsize, budget)
    ta = tile_t_apply if tile_t_apply is not None else _pick_apply_tile(
        C, T, itemsize, budget, B)
    for name, tt in (("tile_t_gate", tg), ("tile_t_apply", ta)):
        if tt % 128 != 0:
            raise ValueError(f"{name}={tt} must be a multiple of 128")

    mean = _afms_mean(x, tg, vmem_limit)                       # (B, C) f32
    y = jax.nn.sigmoid(mean @ w_t + b_row)                     # one (B,C)@(C,C) matmul
    return _afms_apply(x, y, alpha_row, ta, vmem_limit, donate_x)


def afms_reference(x, w, b, alpha):
    """Plain-JAX reference mirroring the PyTorch forward."""
    mean = jnp.mean(x, axis=-1)                                # (B, C)
    y = jax.nn.sigmoid(mean @ w.T + b)                         # (B, C)
    return (x + alpha.reshape(1, -1, 1)) * y[:, :, None]


if __name__ == "__main__":
    key = jax.random.PRNGKey(0)
    B, C, T = 2, 16, 512  # batch, channels (nb_dim), time (lane-dense, 128-aligned)

    kx, kw, kb, kx2 = jax.random.split(key, 4)
    x = jax.random.normal(kx, (B, C, T), dtype=jnp.float32)

    # Deterministic synthetic parameters (shapes match AFMS.__init__):
    alpha = jnp.ones((C, 1), dtype=jnp.float32)          # nn.Parameter(ones((C,1)))
    bound = 1.0 / (C ** 0.5)
    w = jax.random.uniform(kw, (C, C), minval=-bound, maxval=bound,
                           dtype=jnp.float32)
    b = jax.random.uniform(kb, (C,), minval=-bound, maxval=bound,
                           dtype=jnp.float32)

    ref = afms_reference(x, w, b, alpha)

    # 1) Fused path (default): multi-batch (bB, C, T) blocks, 2x HBM traffic.
    out_fused = jax.block_until_ready(afms_forward(x, w, b, alpha))
    assert out_fused.shape == (B, C, T)
    assert jnp.allclose(out_fused, ref, atol=1e-4, rtol=1e-5), (
        f"fused path max abs err = {jnp.max(jnp.abs(out_fused - ref))}")

    # 2) Two-pass path (mean pass + plain-JAX fc + streamed apply), 128-wide tiles.
    out_tiled = jax.block_until_ready(
        afms_forward(x, w, b, alpha, force_two_pass=True,
                     tile_t_gate=128, tile_t_apply=128))
    assert out_tiled.shape == (B, C, T)
    assert jnp.allclose(out_tiled, ref, atol=1e-4, rtol=1e-5), (
        f"tiled path max abs err = {jnp.max(jnp.abs(out_tiled - ref))}")

    # 3) Non-128-aligned T: masked tail in the mean pass, partial boundary
    #    blocks in the apply pass (no full-T fallback).
    T2 = 500
    x2 = jax.random.normal(kx2, (B, C, T2), dtype=jnp.float32)
    ref2 = afms_reference(x2, w, b, alpha)
    out2 = jax.block_until_ready(
        afms_forward(x2, w, b, alpha, force_two_pass=True,
                     tile_t_gate=128, tile_t_apply=128))
    assert out2.shape == (B, C, T2)
    assert jnp.allclose(out2, ref2, atol=1e-4, rtol=1e-5), (
        f"masked-tail path max abs err = {jnp.max(jnp.abs(out2 - ref2))}")

    print("KERNEL_OK")
</pallas_src>

<mosaic_0001>
module attributes {stable_mosaic.version = 11 : i64} {
  func.func @_afms_fused_kernel(%arg0: i32, %arg1: memref<2x16x512xf32, #tpu.memory_space<vmem>>, %arg2: memref<16x16xf32, #tpu.memory_space<vmem>>, %arg3: memref<1x16xf32, #tpu.memory_space<vmem>>, %arg4: memref<1x16xf32, #tpu.memory_space<vmem>>, %arg5: memref<2x16x512xf32, #tpu.memory_space<vmem>>) attributes {dimension_semantics = [#tpu.dimension_semantics<parallel>], iteration_bounds = array<i64: 1>, scalar_prefetch = 0 : i64, scratch_operands = 0 : i64, tpu.core_type = #tpu.core_type<tc>, window_params = [{transform_indices = @transform_0, window_bounds = array<i64: 2, 16, 512>}, {pipeline_mode = #tpu.pipeline_mode<synchronous>, transform_indices = @transform_1, window_bounds = array<i64: 16, 16>}, {pipeline_mode = #tpu.pipeline_mode<synchronous>, transform_indices = @transform_2, window_bounds = array<i64: 1, 16>}, {pipeline_mode = #tpu.pipeline_mode<synchronous>, transform_indices = @transform_3, window_bounds = array<i64: 1, 16>}, {transform_indices = @transform_4, window_bounds = array<i64: 2, 16, 512>}]} {
    %c0 = arith.constant 0 : index
    %c0_0 = arith.constant 0 : index
    %c0_1 = arith.constant 0 : index
    %0 = vector.load %arg1[%c0, %c0_0, %c0_1] : memref<2x16x512xf32, #tpu.memory_space<vmem>>, vector<2x16x512xf32>
    %cst = arith.constant dense<0.000000e+00> : vector<2x16xf32>
    %1 = vector.multi_reduction <add>, %0, %cst [2] : vector<2x16x512xf32> to vector<2x16xf32>
    %cst_2 = arith.constant 0.001953125 : f32
    %2 = vector.broadcast %cst_2 : f32 to vector<2x16xf32>
    %3 = arith.mulf %1, %2 : vector<2x16xf32>
    %c0_3 = arith.constant 0 : index
    %c0_4 = arith.constant 0 : index
    %4 = vector.load %arg2[%c0_3, %c0_4] : memref<16x16xf32, #tpu.memory_space<vmem>>, vector<16x16xf32>
    %cst_5 = arith.constant dense<0.000000e+00> : vector<2x16xf32>
    %5 = tpu.matmul %3, %4, %cst_5 {dimension_numbers = #tpu.dot_dimension_numbers<[1], [0], [0], [1], [0, 0, 1, 1], [], []>} : vector<2x16xf32>, vector<16x16xf32>, vector<2x16xf32> -> vector<2x16xf32>
    %c0_6 = arith.constant 0 : index
    %c0_7 = arith.constant 0 : index
    %6 = vector.load %arg3[%c0_6, %c0_7] : memref<1x16xf32, #tpu.memory_space<vmem>>, vector<1x16xf32>
    %7 = vector.broadcast %6 : vector<1x16xf32> to vector<2x16xf32>
    %8 = arith.addf %5, %7 : vector<2x16xf32>
    %9 = arith.negf %8 : vector<2x16xf32>
    %10 = math.exp %9 : vector<2x16xf32>
    %cst_8 = arith.constant 1.000000e+00 : f32
    %11 = vector.broadcast %cst_8 : f32 to vector<2x16xf32>
    %12 = arith.addf %11, %10 : vector<2x16xf32>
    %13 = arith.divf %11, %12 : vector<2x16xf32>
    %14 = vector.shape_cast %13 : vector<2x16xf32> to vector<2x16x1xf32>
    %c0_9 = arith.constant 0 : index
    %c0_10 = arith.constant 0 : index
    %15 = vector.load %arg4[%c0_9, %c0_10] : memref<1x16xf32, #tpu.memory_space<vmem>>, vector<1x16xf32>
    %16 = vector.shape_cast %15 : vector<1x16xf32> to vector<1x16x1xf32>
    %17 = vector.broadcast %16 : vector<1x16x1xf32> to vector<2x16x512xf32>
    %18 = arith.addf %0, %17 : vector<2x16x512xf32>
    %19 = vector.broadcast %14 : vector<2x16x1xf32> to vector<2x16x512xf32>
    %20 = arith.mulf %18, %19 : vector<2x16x512xf32>
    %c0_11 = arith.constant 0 : index
    %c0_12 = arith.constant 0 : index
    %c0_13 = arith.constant 0 : index
    %21 = vector.load %arg5[%c0_11, %c0_12, %c0_13] : memref<2x16x512xf32, #tpu.memory_space<vmem>>, vector<2x16x512xf32>
    tpu.vector_store %arg5[%c0_11, %c0_12, %c0_13], %20 {strides = array<i32>} : memref<2x16x512xf32, #tpu.memory_space<vmem>>, vector<2x16x512xf32>,
    return
  }
  func.func @transform_0(%arg0: i32) -> (i32, i32, i32) {
    %c0_i32 = arith.constant 0 : i32
    %c0_i32_0 = arith.constant 0 : i32
    %c0_i32_1 = arith.constant 0 : i32
    return %arg0, %c0_i32, %c0_i32_0 : i32, i32, i32
  }
  func.func @transform_1(%arg0: i32) -> (i32, i32) {
    %c0_i32 = arith.constant 0 : i32
    %c0_i32_0 = arith.constant 0 : i32
    %c0_i32_1 = arith.constant 0 : i32
    return %c0_i32, %c0_i32_0 : i32, i32
  }
  func.func @transform_2(%arg0: i32) -> (i32, i32) {
    %c0_i32 = arith.constant 0 : i32
    %c0_i32_0 = arith.constant 0 : i32
    %c0_i32_1 = arith.constant 0 : i32
    return %c0_i32, %c0_i32_0 : i32, i32
  }
  func.func @transform_3(%arg0: i32) -> (i32, i32) {
    %c0_i32 = arith.constant 0 : i32
    %c0_i32_0 = arith.constant 0 : i32
    %c0_i32_1 = arith.constant 0 : i32
    return %c0_i32, %c0_i32_0 : i32, i32
  }
  func.func @transform_4(%arg0: i32) -> (i32, i32, i32) {
    %c0_i32 = arith.constant 0 : i32
    %c0_i32_0 = arith.constant 0 : i32
    %c0_i32_1 = arith.constant 0 : i32
    return %arg0, %c0_i32, %c0_i32_0 : i32, i32, i32
  }
}

</mosaic_0001>

<llo_original>
// kernel: tpu_custom_call.1
$region0: #{tpu_custom_call.1}
  #allocation0 [shape = 'u32[]', space=smem, size = 0x4, offset = 0x4, fixed_abs, tag = 'smem constant byte address 0x4 - core index']
  #allocation1 [shape = 'u32[144,128]{1,0:T(1,128)}', space=vmem, size = 0x12000, scoped, tag = 'internal scratch']
  %s0 = inlined_call_operand.hbm [shape: f32[2,16,512], index: 0, kind: input, shape index: {}]
  %s1 = inlined_call_operand.hbm [shape: f32[16,16], index: 1, kind: input, shape index: {}]
  %s2 = inlined_call_operand.vmem [shape: f32[1,16], index: 2, kind: input, shape index: {}]
  %s3 = inlined_call_operand.vmem [shape: f32[1,16], index: 3, kind: input, shape index: {}]
  %s4 = inlined_call_operand.hbm [shape: f32[2,16,512], index: 4, kind: output, shape index: {}]
  %s5 = sld [smem:[#allocation0]]
  $region34: #{tpu_custom_call.1} parent=0
    _
  %s7 = ssub.s32 1, %s5
  %s8 = scalar_select 0, %s7, %s5
  $region1: #{tpu_custom_call.1} parent=0
    #allocation2 [shape = 'u8[65536]{0}', space=vmem, size = 0x10000, scoped, tag = 'input window, operand 0, single buffered']
    #allocation3 [shape = 's32[1]{0}', space=sflag, size = 0x4, scoped, tag = 'scoped memory for tpu_custom_call.1']
    #allocation4 [shape = 's32[1]{0}', space=sflag, size = 0x4, scoped, tag = 'scoped memory for tpu_custom_call.1']
    #allocation5 [shape = 'u8[8192]{0}', space=vmem, size = 0x2000, scoped, tag = 'input window, operand 1, single buffered']
    #allocation6 [shape = 's32[1]{0}', space=sflag, size = 0x4, scoped, tag = 'scoped memory for tpu_custom_call.1']
    #allocation7 [shape = 'u8[65536]{0}', space=vmem, size = 0x10000, scoped, tag = 'output window, operand 0, single buffered']
    %9 = vsyncpa [#allocation3], 0
    %10 = vsyncpa [#allocation6], 0
    %11 = vsyncpa [#allocation4], 0
    // Predicated region
    $region2: #{tpu_custom_call.1} parent=1 // pred_check
      _
    $region3: #{tpu_custom_call.1} parent=1 // pred_check_branch
      %13 = sbr.rel (0) target = $region5
    $region4: #{tpu_custom_call.1} parent=1 // pred_region
      %s15 = ssub.s32 2048, 2048
      %16 = vsyncadd [#allocation3], %s15
      %s17 = sshll.u32 [#allocation2], 4
      %s18 = int_to_ptr.vmem [resolvable:$true] %s17
      %23 = dma.hbm_to_vmem [thread:$0]  %s0, 2048, %s18, [#allocation3], 512, 512, 32
    $region5: #{tpu_custom_call.1} parent=1 // pred_fallthru
      _
    // Predicated region
    $region6: #{tpu_custom_call.1} parent=1 // pred_check
      _
    $region7: #{tpu_custom_call.1} parent=1 // pred_check_branch
      %25 = sbr.rel (0) target = $region9
    $region8: #{tpu_custom_call.1} parent=1 // pred_region
      %s27 = ssub.s32 256, 256
      %28 = vsyncadd [#allocation6], %s27
      %s29 = sshll.u32 [#allocation5], 4
      %s30 = int_to_ptr.vmem [resolvable:$true] %s29
      %35 = dma.hbm_to_vmem [thread:$0]  %s1, 256, %s30, [#allocation6], 128, 128, 8
    $region9: #{tpu_custom_call.1} parent=1 // pred_fallthru
      _
    // Predicated region
    $region10: #{tpu_custom_call.1} parent=1 // pred_check
      _
    $region11: #{tpu_custom_call.1} parent=1 // pred_check_branch
      %37 = sbr.rel (0) target = $region13
    $region12: #{tpu_custom_call.1} parent=1 // pred_region
      _
    $region13: #{tpu_custom_call.1} parent=1 // pred_fallthru
      _
    // Predicated region
    $region14: #{tpu_custom_call.1} parent=1 // pred_check
      _
    $region15: #{tpu_custom_call.1} parent=1 // pred_check_branch
      %39 = sbr.rel (0) target = $region17
    $region16: #{tpu_custom_call.1} parent=1 // pred_region
      _
    $region17: #{tpu_custom_call.1} parent=1 // pred_fallthru
      _
    // Predicated region
    $region18: #{tpu_custom_call.1} parent=1 // pred_check
      _
    $region19: #{tpu_custom_call.1} parent=1 // pred_check_branch
      %41 = sbr.rel (0) target = $region21
    $region20: #{tpu_custom_call.1} parent=1 // pred_region
      %42 = dma.done [#allocation3], 2048
    $region21: #{tpu_custom_call.1} parent=1 // pred_fallthru
      _
    // Predicated region
    $region22: #{tpu_custom_call.1} parent=1 // pred_check
      _
    $region23: #{tpu_custom_call.1} parent=1 // pred_check_branch
      %44 = sbr.rel (0) target = $region25
    $region24: #{tpu_custom_call.1} parent=1 // pred_region
      %45 = dma.done [#allocation6], 256
    $region25: #{tpu_custom_call.1} parent=1 // pred_fallthru
      _
    %v46 = vld [vmem:[#allocation2] sm:$0xff]
    %v47 = vld [vmem:[#allocation2 + $0x8] sm:$0xff]
    %v48 = vld [vmem:[#allocation2 + $0x10] sm:$0xff]
    %v49 = vld [vmem:[#allocation2 + $0x18] sm:$0xff]
    %v50 = vld [vmem:[#allocation2 + $0x20] sm:$0xff]
    %v51 = vld [vmem:[#allocation2 + $0x28] sm:$0xff]
    %v52 = vld [vmem:[#allocation2 + $0x30] sm:$0xff]
    %v53 = vld [vmem:[#allocation2 + $0x38] sm:$0xff]
    %v54 = vld [vmem:[#allocation2 + $0x40] sm:$0xff]
    %v55 = vld [vmem:[#allocation2 + $0x48] sm:$0xff]
    %v56 = vld [vmem:[#allocation2 + $0x50] sm:$0xff]
    %v57 = vld [vmem:[#allocation2 + $0x58] sm:$0xff]
    %v58 = vld [vmem:[#allocation2 + $0x60] sm:$0xff]
    %v59 = vld [vmem:[#allocation2 + $0x68] sm:$0xff]
    %v60 = vld [vmem:[#allocation2 + $0x70] sm:$0xff]
    %v61 = vld [vmem:[#allocation2 + $0x78] sm:$0xff]
    %v62 = vadd.f32 %v46, %v47
    %v63 = vadd.f32 %v62, %v48
    %v64 = vadd.f32 %v63, %v49
    %65 = vadd.xlane.f32.xlu0 %v64
    %v66 = vpop.xlane.xlu0 %65
    %v67 = vadd.f32 %v50, %v51
    %v68 = vadd.f32 %v67, %v52
    %v69 = vadd.f32 %v68, %v53
    %70 = vadd.xlane.f32.xlu0 %v69
    %v71 = vpop.xlane.xlu0 %70
    %v72 = vadd.f32 %v54, %v55
    %v73 = vadd.f32 %v72, %v56
    %v74 = vadd.f32 %v73, %v57
    %75 = vadd.xlane.f32.xlu0 %v74
    %v76 = vpop.xlane.xlu0 %75
    %v77 = vadd.f32 %v58, %v59
    %v78 = vadd.f32 %v77, %v60
    %v79 = vadd.f32 %v78, %v61
    %80 = vadd.xlane.f32.xlu0 %v79
    %v81 = vpop.xlane.xlu0 %80
    %v82 = vmul.f32 %v66, 0.001953125
    %v83 = vmul.f32 %v71, 0.001953125
    %v84 = vmul.f32 %v76, 0.001953125
    %v85 = vmul.f32 %v81, 0.001953125
    %v86 = vld [vmem:[#allocation5] sm:$0xff]
    %v87 = vld [vmem:[#allocation5 + $0x8] sm:$0xff]
    %v88 = vld [vmem:[%s2] sm:$0x1]
    %v90 = vlaneseq
    %v91 = vshrl.u32 %v90, 7
    %v92 = vsub.s32 0, %v91
    %v93 = vrot.slane %v88, %v92
    %v99 = vlaneseq
    %v100 = vand.u32 %v99, 127
    %v101 = vlaneseq
    %v102 = vshrl.u32 %v101, 7
    %v103 = vsub.s32 %v100, %v102
    %v104 = vrot.slane %v82, %v103
    %v105 = vadd.s32 %v100, 4294967288
    %v106 = vlaneseq
    %v107 = vshrl.u32 %v106, 7
    %v108 = vsub.s32 %v105, %v107
    %v109 = vrot.slane %v83, %v108
    %vm110 = vcmask 130112
    %v111 = vsel %vm110, %v109, %v104
    %v112 = vlaneseq
    %v113 = vshrl.u32 %v112, 7
    %v114 = vsub.s32 %v100, %v113
    %v115 = vrot.slane %v84, %v114
    %v116 = vlaneseq
    %v117 = vshrl.u32 %v116, 7
    %v118 = vsub.s32 %v105, %v117
    %v119 = vrot.slane %v85, %v118
    %v120 = vsel %vm110, %v119, %v115
    %vm121 = vcmask 1041409
    %v122 = vsel %vm121, %v120, %v111
    %vm123 = vcmask 130048
    %v124 = vsel %vm123, %v122, 0
    %126 = vmatprep.subr.mxu0 0.0
    %127 = vmatpush1.msra.mxu0 %v86
    %128 = vmatprep.subr.mxu0 0.0
    %129 = vmatpush1.msra.mxu0 %v87
    %130 = vmatprep.subr.mxu0 0.0
    %131 = vmatpush1.msra.mxu0 0.0
    %132 = vmatprep.subr.mxu0 0.0
    %133 = vmatpush1.msra.mxu0 0.0
    %134 = vmatprep.subr.mxu0 0.0
    %135 = vmatpush1.msra.mxu0 0.0
    %136 = vmatprep.subr.mxu0 0.0
    %137 = vmatpush1.msra.mxu0 0.0
    %138 = vmatprep.subr.mxu0 0.0
    %139 = vmatpush1.msra.mxu0 0.0
    %140 = vmatprep.subr.mxu0 0.0
    %141 = vmatpush1.msra.mxu0 0.0
    %142 = vmatprep.subr.mxu0 0.0
    %143 = vmatpush1.msra.mxu0 0.0
    %144 = vmatprep.subr.mxu0 0.0
    %145 = vmatpush1.msra.mxu0 0.0
    %146 = vmatprep.subr.mxu0 0.0
    %147 = vmatpush1.msra.mxu0 0.0
    %148 = vmatprep.subr.mxu0 0.0
    %149 = vmatpush1.msra.mxu0 0.0
    %150 = vmatprep.subr.mxu0 0.0
    %151 = vmatpush1.msra.mxu0 0.0
    %152 = vmatprep.subr.mxu0 0.0
    %153 = vmatpush1.msra.mxu0 0.0
    %154 = vmatprep.subr.mxu0 0.0
    %155 = vmatpush1.msra.mxu0 0.0
    %156 = vmatprep.subr.mxu0 0.0
    %157 = vmatpush1.msra.mxu0 0.0
    %158 = vmatprep.subr.mxu0 0.0
    %159 = vmatpush1.msra.mxu0 0.0
    %160 = vmatprep.subr.mxu0 0.0
    %161 = vmatpush1.msra.mxu0 0.0
    %162 = vmatprep.subr.mxu0 0.0
    %163 = vmatpush1.msra.mxu0 0.0
    %164 = vmatprep.subr.mxu0 0.0
    %165 = vmatpush1.msra.mxu0 0.0
    %166 = vmatprep.subr.mxu0 0.0
    %167 = vmatpush1.msra.mxu0 0.0
    %168 = vmatprep.subr.mxu0 0.0
    %169 = vmatpush1.msra.mxu0 0.0
    %170 = vmatprep.subr.mxu0 0.0
    %171 = vmatpush1.msra.mxu0 0.0
    %172 = vmatprep.subr.mxu0 0.0
    %173 = vmatpush1.msra.mxu0 0.0
    %174 = vmatprep.subr.mxu0 0.0
    %175 = vmatpush1.msra.mxu0 0.0
    %176 = vmatprep.subr.mxu0 0.0
    %177 = vmatpush1.msra.mxu0 0.0
    %178 = vmatprep.subr.mxu0 0.0
    %179 = vmatpush1.msra.mxu0 0.0
    %180 = vmatprep.subr.mxu0 0.0
    %181 = vmatpush1.msra.mxu0 0.0
    %182 = vmatprep.subr.mxu0 0.0
    %183 = vmatpush1.msra.mxu0 0.0
    %184 = vmatprep.subr.mxu0 0.0
    %185 = vmatpush1.msra.mxu0 0.0
    %186 = vmatprep.subr.mxu0 0.0
    %187 = vmatpush1.msra.mxu0 0.0
    %188 = vmatprep.subr.mxu0 0.0
    %189 = vmatpush1.msra.mxu0 0.0
    %190 = vmatprep.mubr.f32.mxu0 0.0
    %191 = vmatmul.mubr.f32.gmra.mrb[0].mxu0 %v124
    %v192 = vpop.f32.mrb[0].mxu0
    %v193 = vadd.f32 %v93, %v192
    %v194 = vpop.f32.mrb[0].mxu0
    %195 = vdwg.mxu0
    %v196 = vxor.u32 %v193, 2147483648
    %v197 = vmul.f32 %v196, 1.442695
    %v198 = vpow.pop %v197
    %v199 = vadd.f32 %v198, 1.0
    %v200 = vrcp.pop %v199
    %v201 = vmul.f32 1.0, %v200
    %v202 = vlaneseq
    %v203 = vshrl.u32 %v202, 7
    %v204 = vsub.s32 0, %v203
    %v205 = vrot.slane %v201, %v204
    %207 = vbcast.lane.b32.xlu0 %v205, 256
    %v208 = vpop.permute.xlu0 %207
    %s210 = sor.u32 256, 8
    %211 = vbcast.lane.b32.xlu0 %v205, %s210
    %v212 = vpop.permute.xlu0 %211
    %v213 = vlaneseq
    %v214 = vshrl.u32 %v213, 7
    %v215 = vsub.s32 1, %v214
    %v216 = vrot.slane %v201, %v215
    %218 = vbcast.lane.b32.xlu0 %v216, 256
    %v219 = vpop.permute.xlu0 %218
    %s221 = sor.u32 256, 8
    %222 = vbcast.lane.b32.xlu0 %v216, %s221
    %v223 = vpop.permute.xlu0 %222
    %v224 = vld [vmem:[%s3] sm:$0x1]
    %v225 = vlaneseq
    %v226 = vshrl.u32 %v225, 7
    %v227 = vsub.s32 0, %v226
    %v228 = vrot.slane %v224, %v227
    %230 = vbcast.lane.b32.xlu0 %v228, 256
    %v231 = vpop.permute.xlu0 %230
    %s233 = sor.u32 256, 8
    %234 = vbcast.lane.b32.xlu0 %v228, %s233
    %v235 = vpop.permute.xlu0 %234
    %v236 = vadd.f32 %v46, %v231
    %v237 = vadd.f32 %v47, %v231
    %v238 = vadd.f32 %v48, %v231
    %v239 = vadd.f32 %v49, %v231
    %v240 = vadd.f32 %v50, %v235
    %v241 = vadd.f32 %v51, %v235
    %v242 = vadd.f32 %v52, %v235
    %v243 = vadd.f32 %v53, %v235
    %v244 = vadd.f32 %v54, %v231
    %v245 = vadd.f32 %v55, %v231
    %v246 = vadd.f32 %v56, %v231
    %v247 = vadd.f32 %v57, %v231
    %v248 = vadd.f32 %v58, %v235
    %v249 = vadd.f32 %v59, %v235
    %v250 = vadd.f32 %v60, %v235
    %v251 = vadd.f32 %v61, %v235
    %v252 = vmul.f32 %v236, %v208
    %v253 = vmul.f32 %v237, %v208
    %v254 = vmul.f32 %v238, %v208
    %v255 = vmul.f32 %v239, %v208
    %v256 = vmul.f32 %v240, %v212
    %v257 = vmul.f32 %v241, %v212
    %v258 = vmul.f32 %v242, %v212
    %v259 = vmul.f32 %v243, %v212
    %v260 = vmul.f32 %v244, %v219
    %v261 = vmul.f32 %v245, %v219
    %v262 = vmul.f32 %v246, %v219
    %v263 = vmul.f32 %v247, %v219
    %v264 = vmul.f32 %v248, %v223
    %v265 = vmul.f32 %v249, %v223
    %v266 = vmul.f32 %v250, %v223
    %v267 = vmul.f32 %v251, %v223
    %268 = vst [vmem:[#allocation7] sm:$0xff] %v252
    %269 = vst [vmem:[#allocation7 + $0x8] sm:$0xff] %v253
    %270 = vst [vmem:[#allocation7 + $0x10] sm:$0xff] %v254
    %271 = vst [vmem:[#allocation7 + $0x18] sm:$0xff] %v255
    %272 = vst [vmem:[#allocation7 + $0x20] sm:$0xff] %v256
    %273 = vst [vmem:[#allocation7 + $0x28] sm:$0xff] %v257
    %274 = vst [vmem:[#allocation7 + $0x30] sm:$0xff] %v258
    %275 = vst [vmem:[#allocation7 + $0x38] sm:$0xff] %v259
    %276 = vst [vmem:[#allocation7 + $0x40] sm:$0xff] %v260
    %277 = vst [vmem:[#allocation7 + $0x48] sm:$0xff] %v261
    %278 = vst [vmem:[#allocation7 + $0x50] sm:$0xff] %v262
    %279 = vst [vmem:[#allocation7 + $0x58] sm:$0xff] %v263
    %280 = vst [vmem:[#allocation7 + $0x60] sm:$0xff] %v264
    %281 = vst [vmem:[#allocation7 + $0x68] sm:$0xff] %v265
    %282 = vst [vmem:[#allocation7 + $0x70] sm:$0xff] %v266
    %283 = vst [vmem:[#allocation7 + $0x78] sm:$0xff] %v267
    // Predicated region
    $region26: #{tpu_custom_call.1} parent=1 // pred_check
      _
    $region27: #{tpu_custom_call.1} parent=1 // pred_check_branch
      %285 = sbr.rel (0) target = $region29
    $region28: #{tpu_custom_call.1} parent=1 // pred_region
      %s287 = ssub.s32 2048, 2048
      %288 = vsyncadd [#allocation4], %s287
      %s289 = sshll.u32 [#allocation7], 4
      %s290 = int_to_ptr.vmem [resolvable:$true] %s289
      %295 = dma.vmem_to_hbm [thread:$0]  %s290, 2048, %s4, [#allocation4], 512, 512, 32
    $region29: #{tpu_custom_call.1} parent=1 // pred_fallthru
      _
    // Predicated region
    $region30: #{tpu_custom_call.1} parent=1 // pred_check
      _
    $region31: #{tpu_custom_call.1} parent=1 // pred_check_branch
      %297 = sbr.rel (0) target = $region33
    $region32: #{tpu_custom_call.1} parent=1 // pred_region
      %298 = dma.done [#allocation4], 2048
    $region33: #{tpu_custom_call.1} parent=1 // pred_fallthru
      _
    %299 = vsyncpa [#allocation3], 1
    %300 = vsyncpa [#allocation6], 1
    %301 = vsyncpa [#allocation4], 1

</llo_original>
